<compile_context>
chip_gen: v6e
topology: v6e:2x2x1
jax: 0.10.0
libtpu: 0.0.40
codegen_flags: <defaults>
</compile_context>

<pallas_src>
import jax
import jax.numpy as jnp
from jax.experimental import pallas as pl
from jax.experimental.pallas import tpu as pltpu

L = 33          # sequence length (torch.randn(1, 3, 33))
LANES = 128

# Plane indices inside the packed weight slab (34, 8, 128):
#   0..14  conv1 taps (ci*5 + k), 15 = b1
#   16..25 conv2 taps (ci*5 + k), 26 = b2
#   27..32 conv3 taps (ci*3 + k), 33 = b3
_C1, _C2, _C3 = 0, 16, 27


def fused_kernel(x_ref, w_ref, o_ref):
    xv = x_ref[...]                                          # (8,128) padded input
    lane = jax.lax.broadcasted_iota(jnp.int32, (8, LANES), 1)
    valid = lane < L                                         # true conv output lanes

    def conv(src, base, n_ci, K):
        # src: (8,128); rows 0..n_ci-1 hold input channels at lane offset = pad,
        # zeros elsewhere.  Result lane t = conv output position t (t < L valid).
        acc = w_ref[base + n_ci * K]                         # bias plane (8,128)
        for ci in range(n_ci):
            row = jnp.broadcast_to(src[ci:ci + 1, :], (8, LANES))
            for k in range(K):
                # roll(row, 128-k) == roll(row, -k): operand[t] = slab[t + k]
                sh = row if k == 0 else pltpu.roll(row, LANES - k, axis=1)
                acc = acc + w_ref[base + ci * K + k] * sh    # plain vreg mul+add
        return acc

    # conv1: 3 -> 2, K=5, pad=2  (input already at lane offset 2)
    a1 = conv(xv, _C1, 3, 5)
    v1 = pltpu.roll(jnp.where(valid, jnp.maximum(a1, 0.0), 0.0), 2, axis=1)
    # conv2: 2 -> 2, K=5, pad=2
    a2 = conv(v1, _C2, 2, 5)
    v2 = pltpu.roll(jnp.where(valid, jnp.maximum(a2, 0.0), 0.0), 1, axis=1)
    # conv3: 2 -> 4, K=3, pad=1  (rows 4..7 stay exactly 0: zero weight/bias rows)
    a3 = conv(v2, _C3, 2, 3)
    o_ref[...] = jnp.tanh(jnp.maximum(a3, 0.0))              # single unmasked store


def pack_params(params):
    """One-time packing of all weights/biases into a single (34,8,128) slab.

    Each plane holds one tap's per-output-channel weight replicated across the
    128 lanes (sublanes >= n_co are zero), plus one bias plane per layer, so
    the kernel never broadcasts weights.  Called once at init, NOT per call.
    """
    w1, b1, w2, b2, w3, b3 = params
    rows = []

    def add_layer(w, b):
        n_co, n_ci, K = w.shape
        taps = jnp.transpose(w, (1, 2, 0)).reshape(n_ci * K, n_co)   # (taps, co)
        rows.append(jnp.pad(taps, ((0, 0), (0, 8 - n_co))))
        rows.append(jnp.pad(b[None, :], ((0, 0), (0, 8 - n_co))))

    add_layer(w1, b1)
    add_layer(w2, b2)
    add_layer(w3, b3)
    tab = jnp.concatenate(rows, axis=0).astype(jnp.float32)          # (34, 8)
    return jnp.broadcast_to(tab[:, :, None], (34, 8, LANES))         # (34, 8, 128)


def _forward_impl(x, wtab):
    # Only per-call prep: place the raw (3,L) input at lane offset 2 (= conv1
    # padding) inside an otherwise-zero (8,128) slab -- one XLA pad op.
    xpad = jnp.pad(x[0].astype(jnp.float32), ((0, 5), (2, LANES - 2 - L)))

    vmem = pl.BlockSpec(memory_space=pltpu.MemorySpace.VMEM)
    out = pl.pallas_call(
        fused_kernel,
        out_shape=jax.ShapeDtypeStruct((8, LANES), jnp.float32),
        in_specs=[vmem, vmem],
        out_specs=vmem,
    )(xpad, wtab)
    return out[:4, :L][None]                                         # (1, 4, L)


model_forward = jax.jit(_forward_impl)


def reference(x, params):
    w1, b1, w2, b2, w3, b3 = params

    def conv(v, w, b, pad):
        y = jax.lax.conv_general_dilated(
            v, w, window_strides=(1,), padding=[(pad, pad)],
            dimension_numbers=('NCH', 'OIH', 'NCH'))
        return y + b[None, :, None]

    v1 = jax.nn.relu(conv(x, w1, b1, 2))
    v2 = jax.nn.relu(conv(v1, w2, b2, 2))
    v3 = jax.nn.relu(conv(v2, w3, b3, 1))
    return jnp.tanh(v3)


if __name__ == "__main__":
    key = jax.random.PRNGKey(0)
    ks = jax.random.split(key, 7)
    # Deterministic synthetic parameters (shapes from the module's __init__).
    w1 = jax.random.normal(ks[0], (2, 3, 5), jnp.float32) * 0.2
    b1 = jax.random.normal(ks[1], (2,), jnp.float32) * 0.1
    w2 = jax.random.normal(ks[2], (2, 2, 5), jnp.float32) * 0.2
    b2 = jax.random.normal(ks[3], (2,), jnp.float32) * 0.1
    w3 = jax.random.normal(ks[4], (4, 2, 3), jnp.float32) * 0.2
    b3 = jax.random.normal(ks[5], (4,), jnp.float32) * 0.1
    params = (w1, b1, w2, b2, w3, b3)

    wtab = pack_params(params)          # one-time weight packing (hoisted)
    x = jax.random.normal(ks[6], (1, 3, L), jnp.float32)

    out = jax.block_until_ready(model_forward(x, wtab))
    ref = jax.block_until_ready(reference(x, params))

    assert out.shape == (1, 4, L), out.shape
    assert jnp.allclose(out, ref, atol=1e-4, rtol=1e-4), "mismatch vs JAX reference"
    print("KERNEL_OK")
</pallas_src>

<mosaic_0001>
module attributes {stable_mosaic.version = 11 : i64} {
  func.func @fused_kernel(%arg0: memref<8x128xf32, #tpu.memory_space<vmem>>, %arg1: memref<34x8x128xf32, #tpu.memory_space<vmem>>, %arg2: memref<8x128xf32, #tpu.memory_space<vmem>>) attributes {dimension_semantics = [], scalar_prefetch = 0 : i64, scratch_operands = 0 : i64, tpu.core_type = #tpu.core_type<tc>} {
    %c0 = arith.constant 0 : index
    %c0_0 = arith.constant 0 : index
    %0 = vector.load %arg0[%c0, %c0_0] : memref<8x128xf32, #tpu.memory_space<vmem>>, vector<8x128xf32>
    %1 = tpu.iota {dimensions = array<i32: 1>} : vector<8x128xi32>
    %c33_i32 = arith.constant 33 : i32
    %2 = vector.broadcast %c33_i32 : i32 to vector<8x128xi32>
    %3 = arith.cmpi slt, %1, %2 : vector<8x128xi32>
    %c15 = arith.constant 15 : index
    %c0_1 = arith.constant 0 : index
    %c0_2 = arith.constant 0 : index
    %4 = vector.load %arg1[%c15, %c0_1, %c0_2] : memref<34x8x128xf32, #tpu.memory_space<vmem>>, vector<1x8x128xf32>
    %5 = vector.shape_cast %4 : vector<1x8x128xf32> to vector<8x128xf32>
    %6 = vector.extract_strided_slice %0 {offsets = [0, 0], sizes = [1, 128], strides = [1, 1]} : vector<8x128xf32> to vector<1x128xf32>
    %7 = vector.shape_cast %6 : vector<1x128xf32> to vector<1x128xf32>
    %8 = vector.broadcast %7 : vector<1x128xf32> to vector<8x128xf32>
    %c0_3 = arith.constant 0 : index
    %c0_4 = arith.constant 0 : index
    %c0_5 = arith.constant 0 : index
    %9 = vector.load %arg1[%c0_3, %c0_4, %c0_5] : memref<34x8x128xf32, #tpu.memory_space<vmem>>, vector<1x8x128xf32>
    %10 = vector.shape_cast %9 : vector<1x8x128xf32> to vector<8x128xf32>
    %11 = arith.mulf %10, %8 : vector<8x128xf32>
    %12 = arith.addf %5, %11 : vector<8x128xf32>
    %c127_i32 = arith.constant 127 : i32
    %13 = tpu.dynamic_rotate %8 by %c127_i32 dim 1 : vector<8x128xf32>, i32 -> vector<8x128xf32>
    %c1 = arith.constant 1 : index
    %c0_6 = arith.constant 0 : index
    %c0_7 = arith.constant 0 : index
    %14 = vector.load %arg1[%c1, %c0_6, %c0_7] : memref<34x8x128xf32, #tpu.memory_space<vmem>>, vector<1x8x128xf32>
    %15 = vector.shape_cast %14 : vector<1x8x128xf32> to vector<8x128xf32>
    %16 = arith.mulf %15, %13 : vector<8x128xf32>
    %17 = arith.addf %12, %16 : vector<8x128xf32>
    %c126_i32 = arith.constant 126 : i32
    %18 = tpu.dynamic_rotate %8 by %c126_i32 dim 1 : vector<8x128xf32>, i32 -> vector<8x128xf32>
    %c2 = arith.constant 2 : index
    %c0_8 = arith.constant 0 : index
    %c0_9 = arith.constant 0 : index
    %19 = vector.load %arg1[%c2, %c0_8, %c0_9] : memref<34x8x128xf32, #tpu.memory_space<vmem>>, vector<1x8x128xf32>
    %20 = vector.shape_cast %19 : vector<1x8x128xf32> to vector<8x128xf32>
    %21 = arith.mulf %20, %18 : vector<8x128xf32>
    %22 = arith.addf %17, %21 : vector<8x128xf32>
    %c125_i32 = arith.constant 125 : i32
    %23 = tpu.dynamic_rotate %8 by %c125_i32 dim 1 : vector<8x128xf32>, i32 -> vector<8x128xf32>
    %c3 = arith.constant 3 : index
    %c0_10 = arith.constant 0 : index
    %c0_11 = arith.constant 0 : index
    %24 = vector.load %arg1[%c3, %c0_10, %c0_11] : memref<34x8x128xf32, #tpu.memory_space<vmem>>, vector<1x8x128xf32>
    %25 = vector.shape_cast %24 : vector<1x8x128xf32> to vector<8x128xf32>
    %26 = arith.mulf %25, %23 : vector<8x128xf32>
    %27 = arith.addf %22, %26 : vector<8x128xf32>
    %c124_i32 = arith.constant 124 : i32
    %28 = tpu.dynamic_rotate %8 by %c124_i32 dim 1 : vector<8x128xf32>, i32 -> vector<8x128xf32>
    %c4 = arith.constant 4 : index
    %c0_12 = arith.constant 0 : index
    %c0_13 = arith.constant 0 : index
    %29 = vector.load %arg1[%c4, %c0_12, %c0_13] : memref<34x8x128xf32, #tpu.memory_space<vmem>>, vector<1x8x128xf32>
    %30 = vector.shape_cast %29 : vector<1x8x128xf32> to vector<8x128xf32>
    %31 = arith.mulf %30, %28 : vector<8x128xf32>
    %32 = arith.addf %27, %31 : vector<8x128xf32>
    %33 = vector.extract_strided_slice %0 {offsets = [1, 0], sizes = [1, 128], strides = [1, 1]} : vector<8x128xf32> to vector<1x128xf32>
    %34 = vector.shape_cast %33 : vector<1x128xf32> to vector<1x128xf32>
    %35 = vector.broadcast %34 : vector<1x128xf32> to vector<8x128xf32>
    %c5 = arith.constant 5 : index
    %c0_14 = arith.constant 0 : index
    %c0_15 = arith.constant 0 : index
    %36 = vector.load %arg1[%c5, %c0_14, %c0_15] : memref<34x8x128xf32, #tpu.memory_space<vmem>>, vector<1x8x128xf32>
    %37 = vector.shape_cast %36 : vector<1x8x128xf32> to vector<8x128xf32>
    %38 = arith.mulf %37, %35 : vector<8x128xf32>
    %39 = arith.addf %32, %38 : vector<8x128xf32>
    %c127_i32_16 = arith.constant 127 : i32
    %40 = tpu.dynamic_rotate %35 by %c127_i32_16 dim 1 : vector<8x128xf32>, i32 -> vector<8x128xf32>
    %c6 = arith.constant 6 : index
    %c0_17 = arith.constant 0 : index
    %c0_18 = arith.constant 0 : index
    %41 = vector.load %arg1[%c6, %c0_17, %c0_18] : memref<34x8x128xf32, #tpu.memory_space<vmem>>, vector<1x8x128xf32>
    %42 = vector.shape_cast %41 : vector<1x8x128xf32> to vector<8x128xf32>
    %43 = arith.mulf %42, %40 : vector<8x128xf32>
    %44 = arith.addf %39, %43 : vector<8x128xf32>
    %c126_i32_19 = arith.constant 126 : i32
    %45 = tpu.dynamic_rotate %35 by %c126_i32_19 dim 1 : vector<8x128xf32>, i32 -> vector<8x128xf32>
    %c7 = arith.constant 7 : index
    %c0_20 = arith.constant 0 : index
    %c0_21 = arith.constant 0 : index
    %46 = vector.load %arg1[%c7, %c0_20, %c0_21] : memref<34x8x128xf32, #tpu.memory_space<vmem>>, vector<1x8x128xf32>
    %47 = vector.shape_cast %46 : vector<1x8x128xf32> to vector<8x128xf32>
    %48 = arith.mulf %47, %45 : vector<8x128xf32>
    %49 = arith.addf %44, %48 : vector<8x128xf32>
    %c125_i32_22 = arith.constant 125 : i32
    %50 = tpu.dynamic_rotate %35 by %c125_i32_22 dim 1 : vector<8x128xf32>, i32 -> vector<8x128xf32>
    %c8 = arith.constant 8 : index
    %c0_23 = arith.constant 0 : index
    %c0_24 = arith.constant 0 : index
    %51 = vector.load %arg1[%c8, %c0_23, %c0_24] : memref<34x8x128xf32, #tpu.memory_space<vmem>>, vector<1x8x128xf32>
    %52 = vector.shape_cast %51 : vector<1x8x128xf32> to vector<8x128xf32>
    %53 = arith.mulf %52, %50 : vector<8x128xf32>
    %54 = arith.addf %49, %53 : vector<8x128xf32>
    %c124_i32_25 = arith.constant 124 : i32
    %55 = tpu.dynamic_rotate %35 by %c124_i32_25 dim 1 : vector<8x128xf32>, i32 -> vector<8x128xf32>
    %c9 = arith.constant 9 : index
    %c0_26 = arith.constant 0 : index
    %c0_27 = arith.constant 0 : index
    %56 = vector.load %arg1[%c9, %c0_26, %c0_27] : memref<34x8x128xf32, #tpu.memory_space<vmem>>, vector<1x8x128xf32>
    %57 = vector.shape_cast %56 : vector<1x8x128xf32> to vector<8x128xf32>
    %58 = arith.mulf %57, %55 : vector<8x128xf32>
    %59 = arith.addf %54, %58 : vector<8x128xf32>
    %60 = vector.extract_strided_slice %0 {offsets = [2, 0], sizes = [1, 128], strides = [1, 1]} : vector<8x128xf32> to vector<1x128xf32>
    %61 = vector.shape_cast %60 : vector<1x128xf32> to vector<1x128xf32>
    %62 = vector.broadcast %61 : vector<1x128xf32> to vector<8x128xf32>
    %c10 = arith.constant 10 : index
    %c0_28 = arith.constant 0 : index
    %c0_29 = arith.constant 0 : index
    %63 = vector.load %arg1[%c10, %c0_28, %c0_29] : memref<34x8x128xf32, #tpu.memory_space<vmem>>, vector<1x8x128xf32>
    %64 = vector.shape_cast %63 : vector<1x8x128xf32> to vector<8x128xf32>
    %65 = arith.mulf %64, %62 : vector<8x128xf32>
    %66 = arith.addf %59, %65 : vector<8x128xf32>
    %c127_i32_30 = arith.constant 127 : i32
    %67 = tpu.dynamic_rotate %62 by %c127_i32_30 dim 1 : vector<8x128xf32>, i32 -> vector<8x128xf32>
    %c11 = arith.constant 11 : index
    %c0_31 = arith.constant 0 : index
    %c0_32 = arith.constant 0 : index
    %68 = vector.load %arg1[%c11, %c0_31, %c0_32] : memref<34x8x128xf32, #tpu.memory_space<vmem>>, vector<1x8x128xf32>
    %69 = vector.shape_cast %68 : vector<1x8x128xf32> to vector<8x128xf32>
    %70 = arith.mulf %69, %67 : vector<8x128xf32>
    %71 = arith.addf %66, %70 : vector<8x128xf32>
    %c126_i32_33 = arith.constant 126 : i32
    %72 = tpu.dynamic_rotate %62 by %c126_i32_33 dim 1 : vector<8x128xf32>, i32 -> vector<8x128xf32>
    %c12 = arith.constant 12 : index
    %c0_34 = arith.constant 0 : index
    %c0_35 = arith.constant 0 : index
    %73 = vector.load %arg1[%c12, %c0_34, %c0_35] : memref<34x8x128xf32, #tpu.memory_space<vmem>>, vector<1x8x128xf32>
    %74 = vector.shape_cast %73 : vector<1x8x128xf32> to vector<8x128xf32>
    %75 = arith.mulf %74, %72 : vector<8x128xf32>
    %76 = arith.addf %71, %75 : vector<8x128xf32>
    %c125_i32_36 = arith.constant 125 : i32
    %77 = tpu.dynamic_rotate %62 by %c125_i32_36 dim 1 : vector<8x128xf32>, i32 -> vector<8x128xf32>
    %c13 = arith.constant 13 : index
    %c0_37 = arith.constant 0 : index
    %c0_38 = arith.constant 0 : index
    %78 = vector.load %arg1[%c13, %c0_37, %c0_38] : memref<34x8x128xf32, #tpu.memory_space<vmem>>, vector<1x8x128xf32>
    %79 = vector.shape_cast %78 : vector<1x8x128xf32> to vector<8x128xf32>
    %80 = arith.mulf %79, %77 : vector<8x128xf32>
    %81 = arith.addf %76, %80 : vector<8x128xf32>
    %c124_i32_39 = arith.constant 124 : i32
    %82 = tpu.dynamic_rotate %62 by %c124_i32_39 dim 1 : vector<8x128xf32>, i32 -> vector<8x128xf32>
    %c14 = arith.constant 14 : index
    %c0_40 = arith.constant 0 : index
    %c0_41 = arith.constant 0 : index
    %83 = vector.load %arg1[%c14, %c0_40, %c0_41] : memref<34x8x128xf32, #tpu.memory_space<vmem>>, vector<1x8x128xf32>
    %84 = vector.shape_cast %83 : vector<1x8x128xf32> to vector<8x128xf32>
    %85 = arith.mulf %84, %82 : vector<8x128xf32>
    %86 = arith.addf %81, %85 : vector<8x128xf32>
    %cst = arith.constant 0.000000e+00 : f32
    %87 = vector.broadcast %cst : f32 to vector<8x128xf32>
    %88 = arith.maximumf %86, %87 : vector<8x128xf32>
    %cst_42 = arith.constant 0.000000e+00 : f32
    %89 = vector.broadcast %cst_42 : f32 to vector<8x128xf32>
    %90 = arith.select %3, %88, %89 : vector<8x128xi1>, vector<8x128xf32>
    %c2_i32 = arith.constant 2 : i32
    %91 = tpu.dynamic_rotate %90 by %c2_i32 dim 1 : vector<8x128xf32>, i32 -> vector<8x128xf32>
    %c26 = arith.constant 26 : index
    %c0_43 = arith.constant 0 : index
    %c0_44 = arith.constant 0 : index
    %92 = vector.load %arg1[%c26, %c0_43, %c0_44] : memref<34x8x128xf32, #tpu.memory_space<vmem>>, vector<1x8x128xf32>
    %93 = vector.shape_cast %92 : vector<1x8x128xf32> to vector<8x128xf32>
    %94 = vector.extract_strided_slice %91 {offsets = [0, 0], sizes = [1, 128], strides = [1, 1]} : vector<8x128xf32> to vector<1x128xf32>
    %95 = vector.shape_cast %94 : vector<1x128xf32> to vector<1x128xf32>
    %96 = vector.broadcast %95 : vector<1x128xf32> to vector<8x128xf32>
    %c16 = arith.constant 16 : index
    %c0_45 = arith.constant 0 : index
    %c0_46 = arith.constant 0 : index
    %97 = vector.load %arg1[%c16, %c0_45, %c0_46] : memref<34x8x128xf32, #tpu.memory_space<vmem>>, vector<1x8x128xf32>
    %98 = vector.shape_cast %97 : vector<1x8x128xf32> to vector<8x128xf32>
    %99 = arith.mulf %98, %96 : vector<8x128xf32>
    %100 = arith.addf %93, %99 : vector<8x128xf32>
    %c127_i32_47 = arith.constant 127 : i32
    %101 = tpu.dynamic_rotate %96 by %c127_i32_47 dim 1 : vector<8x128xf32>, i32 -> vector<8x128xf32>
    %c17 = arith.constant 17 : index
    %c0_48 = arith.constant 0 : index
    %c0_49 = arith.constant 0 : index
    %102 = vector.load %arg1[%c17, %c0_48, %c0_49] : memref<34x8x128xf32, #tpu.memory_space<vmem>>, vector<1x8x128xf32>
    %103 = vector.shape_cast %102 : vector<1x8x128xf32> to vector<8x128xf32>
    %104 = arith.mulf %103, %101 : vector<8x128xf32>
    %105 = arith.addf %100, %104 : vector<8x128xf32>
    %c126_i32_50 = arith.constant 126 : i32
    %106 = tpu.dynamic_rotate %96 by %c126_i32_50 dim 1 : vector<8x128xf32>, i32 -> vector<8x128xf32>
    %c18 = arith.constant 18 : index
    %c0_51 = arith.constant 0 : index
    %c0_52 = arith.constant 0 : index
    %107 = vector.load %arg1[%c18, %c0_51, %c0_52] : memref<34x8x128xf32, #tpu.memory_space<vmem>>, vector<1x8x128xf32>
    %108 = vector.shape_cast %107 : vector<1x8x128xf32> to vector<8x128xf32>
    %109 = arith.mulf %108, %106 : vector<8x128xf32>
    %110 = arith.addf %105, %109 : vector<8x128xf32>
    %c125_i32_53 = arith.constant 125 : i32
    %111 = tpu.dynamic_rotate %96 by %c125_i32_53 dim 1 : vector<8x128xf32>, i32 -> vector<8x128xf32>
    %c19 = arith.constant 19 : index
    %c0_54 = arith.constant 0 : index
    %c0_55 = arith.constant 0 : index
    %112 = vector.load %arg1[%c19, %c0_54, %c0_55] : memref<34x8x128xf32, #tpu.memory_space<vmem>>, vector<1x8x128xf32>
    %113 = vector.shape_cast %112 : vector<1x8x128xf32> to vector<8x128xf32>
    %114 = arith.mulf %113, %111 : vector<8x128xf32>
    %115 = arith.addf %110, %114 : vector<8x128xf32>
    %c124_i32_56 = arith.constant 124 : i32
    %116 = tpu.dynamic_rotate %96 by %c124_i32_56 dim 1 : vector<8x128xf32>, i32 -> vector<8x128xf32>
    %c20 = arith.constant 20 : index
    %c0_57 = arith.constant 0 : index
    %c0_58 = arith.constant 0 : index
    %117 = vector.load %arg1[%c20, %c0_57, %c0_58] : memref<34x8x128xf32, #tpu.memory_space<vmem>>, vector<1x8x128xf32>
    %118 = vector.shape_cast %117 : vector<1x8x128xf32> to vector<8x128xf32>
    %119 = arith.mulf %118, %116 : vector<8x128xf32>
    %120 = arith.addf %115, %119 : vector<8x128xf32>
    %121 = vector.extract_strided_slice %91 {offsets = [1, 0], sizes = [1, 128], strides = [1, 1]} : vector<8x128xf32> to vector<1x128xf32>
    %122 = vector.shape_cast %121 : vector<1x128xf32> to vector<1x128xf32>
    %123 = vector.broadcast %122 : vector<1x128xf32> to vector<8x128xf32>
    %c21 = arith.constant 21 : index
    %c0_59 = arith.constant 0 : index
    %c0_60 = arith.constant 0 : index
    %124 = vector.load %arg1[%c21, %c0_59, %c0_60] : memref<34x8x128xf32, #tpu.memory_space<vmem>>, vector<1x8x128xf32>
    %125 = vector.shape_cast %124 : vector<1x8x128xf32> to vector<8x128xf32>
    %126 = arith.mulf %125, %123 : vector<8x128xf32>
    %127 = arith.addf %120, %126 : vector<8x128xf32>
    %c127_i32_61 = arith.constant 127 : i32
    %128 = tpu.dynamic_rotate %123 by %c127_i32_61 dim 1 : vector<8x128xf32>, i32 -> vector<8x128xf32>
    %c22 = arith.constant 22 : index
    %c0_62 = arith.constant 0 : index
    %c0_63 = arith.constant 0 : index
    %129 = vector.load %arg1[%c22, %c0_62, %c0_63] : memref<34x8x128xf32, #tpu.memory_space<vmem>>, vector<1x8x128xf32>
    %130 = vector.shape_cast %129 : vector<1x8x128xf32> to vector<8x128xf32>
    %131 = arith.mulf %130, %128 : vector<8x128xf32>
    %132 = arith.addf %127, %131 : vector<8x128xf32>
    %c126_i32_64 = arith.constant 126 : i32
    %133 = tpu.dynamic_rotate %123 by %c126_i32_64 dim 1 : vector<8x128xf32>, i32 -> vector<8x128xf32>
    %c23 = arith.constant 23 : index
    %c0_65 = arith.constant 0 : index
    %c0_66 = arith.constant 0 : index
    %134 = vector.load %arg1[%c23, %c0_65, %c0_66] : memref<34x8x128xf32, #tpu.memory_space<vmem>>, vector<1x8x128xf32>
    %135 = vector.shape_cast %134 : vector<1x8x128xf32> to vector<8x128xf32>
    %136 = arith.mulf %135, %133 : vector<8x128xf32>
    %137 = arith.addf %132, %136 : vector<8x128xf32>
    %c125_i32_67 = arith.constant 125 : i32
    %138 = tpu.dynamic_rotate %123 by %c125_i32_67 dim 1 : vector<8x128xf32>, i32 -> vector<8x128xf32>
    %c24 = arith.constant 24 : index
    %c0_68 = arith.constant 0 : index
    %c0_69 = arith.constant 0 : index
    %139 = vector.load %arg1[%c24, %c0_68, %c0_69] : memref<34x8x128xf32, #tpu.memory_space<vmem>>, vector<1x8x128xf32>
    %140 = vector.shape_cast %139 : vector<1x8x128xf32> to vector<8x128xf32>
    %141 = arith.mulf %140, %138 : vector<8x128xf32>
    %142 = arith.addf %137, %141 : vector<8x128xf32>
    %c124_i32_70 = arith.constant 124 : i32
    %143 = tpu.dynamic_rotate %123 by %c124_i32_70 dim 1 : vector<8x128xf32>, i32 -> vector<8x128xf32>
    %c25 = arith.constant 25 : index
    %c0_71 = arith.constant 0 : index
    %c0_72 = arith.constant 0 : index
    %144 = vector.load %arg1[%c25, %c0_71, %c0_72] : memref<34x8x128xf32, #tpu.memory_space<vmem>>, vector<1x8x128xf32>
    %145 = vector.shape_cast %144 : vector<1x8x128xf32> to vector<8x128xf32>
    %146 = arith.mulf %145, %143 : vector<8x128xf32>
    %147 = arith.addf %142, %146 : vector<8x128xf32>
    %cst_73 = arith.constant 0.000000e+00 : f32
    %148 = vector.broadcast %cst_73 : f32 to vector<8x128xf32>
    %149 = arith.maximumf %147, %148 : vector<8x128xf32>
    %cst_74 = arith.constant 0.000000e+00 : f32
    %150 = vector.broadcast %cst_74 : f32 to vector<8x128xf32>
    %151 = arith.select %3, %149, %150 : vector<8x128xi1>, vector<8x128xf32>
    %c1_i32 = arith.constant 1 : i32
    %152 = tpu.dynamic_rotate %151 by %c1_i32 dim 1 : vector<8x128xf32>, i32 -> vector<8x128xf32>
    %c33 = arith.constant 33 : index
    %c0_75 = arith.constant 0 : index
    %c0_76 = arith.constant 0 : index
    %153 = vector.load %arg1[%c33, %c0_75, %c0_76] : memref<34x8x128xf32, #tpu.memory_space<vmem>>, vector<1x8x128xf32>
    %154 = vector.shape_cast %153 : vector<1x8x128xf32> to vector<8x128xf32>
    %155 = vector.extract_strided_slice %152 {offsets = [0, 0], sizes = [1, 128], strides = [1, 1]} : vector<8x128xf32> to vector<1x128xf32>
    %156 = vector.shape_cast %155 : vector<1x128xf32> to vector<1x128xf32>
    %157 = vector.broadcast %156 : vector<1x128xf32> to vector<8x128xf32>
    %c27 = arith.constant 27 : index
    %c0_77 = arith.constant 0 : index
    %c0_78 = arith.constant 0 : index
    %158 = vector.load %arg1[%c27, %c0_77, %c0_78] : memref<34x8x128xf32, #tpu.memory_space<vmem>>, vector<1x8x128xf32>
    %159 = vector.shape_cast %158 : vector<1x8x128xf32> to vector<8x128xf32>
    %160 = arith.mulf %159, %157 : vector<8x128xf32>
    %161 = arith.addf %154, %160 : vector<8x128xf32>
    %c127_i32_79 = arith.constant 127 : i32
    %162 = tpu.dynamic_rotate %157 by %c127_i32_79 dim 1 : vector<8x128xf32>, i32 -> vector<8x128xf32>
    %c28 = arith.constant 28 : index
    %c0_80 = arith.constant 0 : index
    %c0_81 = arith.constant 0 : index
    %163 = vector.load %arg1[%c28, %c0_80, %c0_81] : memref<34x8x128xf32, #tpu.memory_space<vmem>>, vector<1x8x128xf32>
    %164 = vector.shape_cast %163 : vector<1x8x128xf32> to vector<8x128xf32>
    %165 = arith.mulf %164, %162 : vector<8x128xf32>
    %166 = arith.addf %161, %165 : vector<8x128xf32>
    %c126_i32_82 = arith.constant 126 : i32
    %167 = tpu.dynamic_rotate %157 by %c126_i32_82 dim 1 : vector<8x128xf32>, i32 -> vector<8x128xf32>
    %c29 = arith.constant 29 : index
    %c0_83 = arith.constant 0 : index
    %c0_84 = arith.constant 0 : index
    %168 = vector.load %arg1[%c29, %c0_83, %c0_84] : memref<34x8x128xf32, #tpu.memory_space<vmem>>, vector<1x8x128xf32>
    %169 = vector.shape_cast %168 : vector<1x8x128xf32> to vector<8x128xf32>
    %170 = arith.mulf %169, %167 : vector<8x128xf32>
    %171 = arith.addf %166, %170 : vector<8x128xf32>
    %172 = vector.extract_strided_slice %152 {offsets = [1, 0], sizes = [1, 128], strides = [1, 1]} : vector<8x128xf32> to vector<1x128xf32>
    %173 = vector.shape_cast %172 : vector<1x128xf32> to vector<1x128xf32>
    %174 = vector.broadcast %173 : vector<1x128xf32> to vector<8x128xf32>
    %c30 = arith.constant 30 : index
    %c0_85 = arith.constant 0 : index
    %c0_86 = arith.constant 0 : index
    %175 = vector.load %arg1[%c30, %c0_85, %c0_86] : memref<34x8x128xf32, #tpu.memory_space<vmem>>, vector<1x8x128xf32>
    %176 = vector.shape_cast %175 : vector<1x8x128xf32> to vector<8x128xf32>
    %177 = arith.mulf %176, %174 : vector<8x128xf32>
    %178 = arith.addf %171, %177 : vector<8x128xf32>
    %c127_i32_87 = arith.constant 127 : i32
    %179 = tpu.dynamic_rotate %174 by %c127_i32_87 dim 1 : vector<8x128xf32>, i32 -> vector<8x128xf32>
    %c31 = arith.constant 31 : index
    %c0_88 = arith.constant 0 : index
    %c0_89 = arith.constant 0 : index
    %180 = vector.load %arg1[%c31, %c0_88, %c0_89] : memref<34x8x128xf32, #tpu.memory_space<vmem>>, vector<1x8x128xf32>
    %181 = vector.shape_cast %180 : vector<1x8x128xf32> to vector<8x128xf32>
    %182 = arith.mulf %181, %179 : vector<8x128xf32>
    %183 = arith.addf %178, %182 : vector<8x128xf32>
    %c126_i32_90 = arith.constant 126 : i32
    %184 = tpu.dynamic_rotate %174 by %c126_i32_90 dim 1 : vector<8x128xf32>, i32 -> vector<8x128xf32>
    %c32 = arith.constant 32 : index
    %c0_91 = arith.constant 0 : index
    %c0_92 = arith.constant 0 : index
    %185 = vector.load %arg1[%c32, %c0_91, %c0_92] : memref<34x8x128xf32, #tpu.memory_space<vmem>>, vector<1x8x128xf32>
    %186 = vector.shape_cast %185 : vector<1x8x128xf32> to vector<8x128xf32>
    %187 = arith.mulf %186, %184 : vector<8x128xf32>
    %188 = arith.addf %183, %187 : vector<8x128xf32>
    %cst_93 = arith.constant 0.000000e+00 : f32
    %189 = vector.broadcast %cst_93 : f32 to vector<8x128xf32>
    %190 = arith.maximumf %188, %189 : vector<8x128xf32>
    %191 = math.tanh %190 : vector<8x128xf32>
    %c0_94 = arith.constant 0 : index
    %c0_95 = arith.constant 0 : index
    %192 = vector.load %arg2[%c0_94, %c0_95] : memref<8x128xf32, #tpu.memory_space<vmem>>, vector<8x128xf32>
    tpu.vector_store %arg2[%c0_94, %c0_95], %191 {strides = array<i32>} : memref<8x128xf32, #tpu.memory_space<vmem>>, vector<8x128xf32>,
    return
  }
}

</mosaic_0001>

<llo_original>
// kernel: _forward_impl.1
$region0: #{_forward_impl.1}
  #allocation0 [shape = 'u32[]', space=smem, size = 0x4, offset = 0x4, fixed_abs, tag = 'smem constant byte address 0x4 - core index']
  #allocation1 [shape = 'u32[144,128]{1,0:T(1,128)}', space=vmem, size = 0x12000, scoped, tag = 'internal scratch']
  %s0 = inlined_call_operand.vmem [shape: f32[8,128], index: 0, kind: input, shape index: {}]
  %s1 = inlined_call_operand.hbm [shape: f32[34,8,128], index: 1, kind: input, shape index: {}]
  %s2 = inlined_call_operand.vmem [shape: f32[8,128], index: 2, kind: output, shape index: {}]
  %s3 = sld [smem:[#allocation0]]
  $region22: #{_forward_impl.1} parent=0
    _
  %s5 = ssub.s32 1, %s3
  %s6 = scalar_select 0, %s5, %s3
  $region1: #{_forward_impl.1} parent=0
    #allocation2 [shape = 'u8[139264]{0}', space=vmem, size = 0x22000, scoped, tag = 'input window, operand 1, single buffered']
    #allocation3 [shape = 's32[1]{0}', space=sflag, size = 0x4, scoped, tag = 'scoped memory for _forward_impl.1']
    %7 = vsyncpa [#allocation3], 0
    // Predicated region
    $region2: #{_forward_impl.1} parent=1 // pred_check
      _
    $region3: #{_forward_impl.1} parent=1 // pred_check_branch
      %9 = sbr.rel (0) target = $region5
    $region4: #{_forward_impl.1} parent=1 // pred_region
      _
    $region5: #{_forward_impl.1} parent=1 // pred_fallthru
      _
    // Predicated region
    $region6: #{_forward_impl.1} parent=1 // pred_check
      _
    $region7: #{_forward_impl.1} parent=1 // pred_check_branch
      %11 = sbr.rel (0) target = $region9
    $region8: #{_forward_impl.1} parent=1 // pred_region
      %s13 = ssub.s32 4352, 4352
      %14 = vsyncadd [#allocation3], %s13
      %s15 = sshll.u32 [#allocation2], 4
      %s16 = int_to_ptr.vmem [resolvable:$true] %s15
      %21 = dma.hbm_to_vmem [thread:$0]  %s1, 4352, %s16, [#allocation3], 128, 128, 8
    $region9: #{_forward_impl.1} parent=1 // pred_fallthru
      _
    // Predicated region
    $region10: #{_forward_impl.1} parent=1 // pred_check
      _
    $region11: #{_forward_impl.1} parent=1 // pred_check_branch
      %23 = sbr.rel (0) target = $region13
    $region12: #{_forward_impl.1} parent=1 // pred_region
      %24 = dma.done [#allocation3], 4352
    $region13: #{_forward_impl.1} parent=1 // pred_fallthru
      _
    %v25 = vld [vmem:[%s0] sm:$0xff]
    %v26 = vlaneseq
    %v27 = vand.u32 %v26, 127
    %vm28 = vcmp.lt.s32.totalorder %v27, 33
    %s29 = scalar_lea.vmem [#allocation2], 120
    %v30 = vld [vmem:[%s29] sm:$0xff]
    %v31 = vlaneseq
    %v32 = vshrl.u32 %v31, 7
    %v33 = vsub.s32 0, %v32
    %v34 = vrot.slane %v25, %v33
    %v35 = vld [vmem:[#allocation2] sm:$0xff]
    %v36 = vmul.f32 %v35, %v34
    %v37 = vadd.f32 %v30, %v36
    %38 = vrot.lane.b32.xlu0 %v34, 127
    %v39 = vpop.permute.xlu0 %38
    %s40 = scalar_lea.vmem [#allocation2], 8
    %v41 = vld [vmem:[%s40] sm:$0xff]
    %v42 = vmul.f32 %v41, %v39
    %v43 = vadd.f32 %v37, %v42
    %44 = vrot.lane.b32.xlu0 %v34, 126
    %v45 = vpop.permute.xlu0 %44
    %s46 = scalar_lea.vmem [#allocation2], 16
    %v47 = vld [vmem:[%s46] sm:$0xff]
    %v48 = vmul.f32 %v47, %v45
    %v49 = vadd.f32 %v43, %v48
    %50 = vrot.lane.b32.xlu0 %v34, 125
    %v51 = vpop.permute.xlu0 %50
    %s52 = scalar_lea.vmem [#allocation2], 24
    %v53 = vld [vmem:[%s52] sm:$0xff]
    %v54 = vmul.f32 %v53, %v51
    %v55 = vadd.f32 %v49, %v54
    %56 = vrot.lane.b32.xlu0 %v34, 124
    %v57 = vpop.permute.xlu0 %56
    %s58 = scalar_lea.vmem [#allocation2], 32
    %v59 = vld [vmem:[%s58] sm:$0xff]
    %v60 = vmul.f32 %v59, %v57
    %v61 = vadd.f32 %v55, %v60
    %v62 = vlaneseq
    %v63 = vshrl.u32 %v62, 7
    %v64 = vsub.s32 1, %v63
    %v65 = vrot.slane %v25, %v64
    %s66 = scalar_lea.vmem [#allocation2], 40
    %v67 = vld [vmem:[%s66] sm:$0xff]
    %v68 = vmul.f32 %v67, %v65
    %v69 = vadd.f32 %v61, %v68
    %70 = vrot.lane.b32.xlu0 %v65, 127
    %v71 = vpop.permute.xlu0 %70
    %s72 = scalar_lea.vmem [#allocation2], 48
    %v73 = vld [vmem:[%s72] sm:$0xff]
    %v74 = vmul.f32 %v73, %v71
    %v75 = vadd.f32 %v69, %v74
    %76 = vrot.lane.b32.xlu0 %v65, 126
    %v77 = vpop.permute.xlu0 %76
    %s78 = scalar_lea.vmem [#allocation2], 56
    %v79 = vld [vmem:[%s78] sm:$0xff]
    %v80 = vmul.f32 %v79, %v77
    %v81 = vadd.f32 %v75, %v80
    %82 = vrot.lane.b32.xlu0 %v65, 125
    %v83 = vpop.permute.xlu0 %82
    %s84 = scalar_lea.vmem [#allocation2], 64
    %v85 = vld [vmem:[%s84] sm:$0xff]
    %v86 = vmul.f32 %v85, %v83
    %v87 = vadd.f32 %v81, %v86
    %88 = vrot.lane.b32.xlu0 %v65, 124
    %v89 = vpop.permute.xlu0 %88
    %s90 = scalar_lea.vmem [#allocation2], 72
    %v91 = vld [vmem:[%s90] sm:$0xff]
    %v92 = vmul.f32 %v91, %v89
    %v93 = vadd.f32 %v87, %v92
    %v94 = vlaneseq
    %v95 = vshrl.u32 %v94, 7
    %v96 = vsub.s32 2, %v95
    %v97 = vrot.slane %v25, %v96
    %s98 = scalar_lea.vmem [#allocation2], 80
    %v99 = vld [vmem:[%s98] sm:$0xff]
    %v100 = vmul.f32 %v99, %v97
    %v101 = vadd.f32 %v93, %v100
    %102 = vrot.lane.b32.xlu0 %v97, 127
    %v103 = vpop.permute.xlu0 %102
    %s104 = scalar_lea.vmem [#allocation2], 88
    %v105 = vld [vmem:[%s104] sm:$0xff]
    %v106 = vmul.f32 %v105, %v103
    %v107 = vadd.f32 %v101, %v106
    %108 = vrot.lane.b32.xlu0 %v97, 126
    %v109 = vpop.permute.xlu0 %108
    %s110 = scalar_lea.vmem [#allocation2], 96
    %v111 = vld [vmem:[%s110] sm:$0xff]
    %v112 = vmul.f32 %v111, %v109
    %v113 = vadd.f32 %v107, %v112
    %114 = vrot.lane.b32.xlu0 %v97, 125
    %v115 = vpop.permute.xlu0 %114
    %s116 = scalar_lea.vmem [#allocation2], 104
    %v117 = vld [vmem:[%s116] sm:$0xff]
    %v118 = vmul.f32 %v117, %v115
    %v119 = vadd.f32 %v113, %v118
    %120 = vrot.lane.b32.xlu0 %v97, 124
    %v121 = vpop.permute.xlu0 %120
    %s122 = scalar_lea.vmem [#allocation2], 112
    %v123 = vld [vmem:[%s122] sm:$0xff]
    %v124 = vmul.f32 %v123, %v121
    %v125 = vadd.f32 %v119, %v124
    %v126 = vmax.f32 %v125, 0.0
    %v127 = vsel %vm28, %v126, 0.0
    %128 = vrot.lane.b32.xlu0 %v127, 2
    %v129 = vpop.permute.xlu0 %128
    %s130 = scalar_lea.vmem [#allocation2], 208
    %v131 = vld [vmem:[%s130] sm:$0xff]
    %v132 = vlaneseq
    %v133 = vshrl.u32 %v132, 7
    %v134 = vsub.s32 0, %v133
    %v135 = vrot.slane %v129, %v134
    %s136 = scalar_lea.vmem [#allocation2], 128
    %v137 = vld [vmem:[%s136] sm:$0xff]
    %v138 = vmul.f32 %v137, %v135
    %v139 = vadd.f32 %v131, %v138
    %140 = vrot.lane.b32.xlu0 %v135, 127
    %v141 = vpop.permute.xlu0 %140
    %s142 = scalar_lea.vmem [#allocation2], 136
    %v143 = vld [vmem:[%s142] sm:$0xff]
    %v144 = vmul.f32 %v143, %v141
    %v145 = vadd.f32 %v139, %v144
    %146 = vrot.lane.b32.xlu0 %v135, 126
    %v147 = vpop.permute.xlu0 %146
    %s148 = scalar_lea.vmem [#allocation2], 144
    %v149 = vld [vmem:[%s148] sm:$0xff]
    %v150 = vmul.f32 %v149, %v147
    %v151 = vadd.f32 %v145, %v150
    %152 = vrot.lane.b32.xlu0 %v135, 125
    %v153 = vpop.permute.xlu0 %152
    %s154 = scalar_lea.vmem [#allocation2], 152
    %v155 = vld [vmem:[%s154] sm:$0xff]
    %v156 = vmul.f32 %v155, %v153
    %v157 = vadd.f32 %v151, %v156
    %158 = vrot.lane.b32.xlu0 %v135, 124
    %v159 = vpop.permute.xlu0 %158
    %s160 = scalar_lea.vmem [#allocation2], 160
    %v161 = vld [vmem:[%s160] sm:$0xff]
    %v162 = vmul.f32 %v161, %v159
    %v163 = vadd.f32 %v157, %v162
    %v164 = vlaneseq
    %v165 = vshrl.u32 %v164, 7
    %v166 = vsub.s32 1, %v165
    %v167 = vrot.slane %v129, %v166
    %s168 = scalar_lea.vmem [#allocation2], 168
    %v169 = vld [vmem:[%s168] sm:$0xff]
    %v170 = vmul.f32 %v169, %v167
    %v171 = vadd.f32 %v163, %v170
    %172 = vrot.lane.b32.xlu0 %v167, 127
    %v173 = vpop.permute.xlu0 %172
    %s174 = scalar_lea.vmem [#allocation2], 176
    %v175 = vld [vmem:[%s174] sm:$0xff]
    %v176 = vmul.f32 %v175, %v173
    %v177 = vadd.f32 %v171, %v176
    %178 = vrot.lane.b32.xlu0 %v167, 126
    %v179 = vpop.permute.xlu0 %178
    %s180 = scalar_lea.vmem [#allocation2], 184
    %v181 = vld [vmem:[%s180] sm:$0xff]
    %v182 = vmul.f32 %v181, %v179
    %v183 = vadd.f32 %v177, %v182
    %184 = vrot.lane.b32.xlu0 %v167, 125
    %v185 = vpop.permute.xlu0 %184
    %s186 = scalar_lea.vmem [#allocation2], 192
    %v187 = vld [vmem:[%s186] sm:$0xff]
    %v188 = vmul.f32 %v187, %v185
    %v189 = vadd.f32 %v183, %v188
    %190 = vrot.lane.b32.xlu0 %v167, 124
    %v191 = vpop.permute.xlu0 %190
    %s192 = scalar_lea.vmem [#allocation2], 200
    %v193 = vld [vmem:[%s192] sm:$0xff]
    %v194 = vmul.f32 %v193, %v191
    %v195 = vadd.f32 %v189, %v194
    %v196 = vmax.f32 %v195, 0.0
    %v197 = vsel %vm28, %v196, 0.0
    %198 = vrot.lane.b32.xlu0 %v197, 1
    %v199 = vpop.permute.xlu0 %198
    %s200 = scalar_lea.vmem [#allocation2], 264
    %v201 = vld [vmem:[%s200] sm:$0xff]
    %v202 = vlaneseq
    %v203 = vshrl.u32 %v202, 7
    %v204 = vsub.s32 0, %v203
    %v205 = vrot.slane %v199, %v204
    %s206 = scalar_lea.vmem [#allocation2], 216
    %v207 = vld [vmem:[%s206] sm:$0xff]
    %v208 = vmul.f32 %v207, %v205
    %v209 = vadd.f32 %v201, %v208
    %210 = vrot.lane.b32.xlu0 %v205, 127
    %v211 = vpop.permute.xlu0 %210
    %s212 = scalar_lea.vmem [#allocation2], 224
    %v213 = vld [vmem:[%s212] sm:$0xff]
    %v214 = vmul.f32 %v213, %v211
    %v215 = vadd.f32 %v209, %v214
    %216 = vrot.lane.b32.xlu0 %v205, 126
    %v217 = vpop.permute.xlu0 %216
    %s218 = scalar_lea.vmem [#allocation2], 232
    %v219 = vld [vmem:[%s218] sm:$0xff]
    %v220 = vmul.f32 %v219, %v217
    %v221 = vadd.f32 %v215, %v220
    %v222 = vlaneseq
    %v223 = vshrl.u32 %v222, 7
    %v224 = vsub.s32 1, %v223
    %v225 = vrot.slane %v199, %v224
    %s226 = scalar_lea.vmem [#allocation2], 240
    %v227 = vld [vmem:[%s226] sm:$0xff]
    %v228 = vmul.f32 %v227, %v225
    %v229 = vadd.f32 %v221, %v228
    %230 = vrot.lane.b32.xlu0 %v225, 127
    %v231 = vpop.permute.xlu0 %230
    %s232 = scalar_lea.vmem [#allocation2], 248
    %v233 = vld [vmem:[%s232] sm:$0xff]
    %v234 = vmul.f32 %v233, %v231
    %v235 = vadd.f32 %v229, %v234
    %236 = vrot.lane.b32.xlu0 %v225, 126
    %v237 = vpop.permute.xlu0 %236
    %s238 = scalar_lea.vmem [#allocation2], 256
    %v239 = vld [vmem:[%s238] sm:$0xff]
    %v240 = vmul.f32 %v239, %v237
    %v241 = vadd.f32 %v235, %v240
    %v242 = vmax.f32 %v241, 0.0
    %v243 = vtanh.pop %v242
    %244 = vst [vmem:[%s2] sm:$0xff] %v243
    // Predicated region
    $region14: #{_forward_impl.1} parent=1 // pred_check
      _
    $region15: #{_forward_impl.1} parent=1 // pred_check_branch
      %246 = sbr.rel (0) target = $region17
    $region16: #{_forward_impl.1} parent=1 // pred_region
      _
    $region17: #{_forward_impl.1} parent=1 // pred_fallthru
      _
    // Predicated region
    $region18: #{_forward_impl.1} parent=1 // pred_check
      _
    $region19: #{_forward_impl.1} parent=1 // pred_check_branch
      %248 = sbr.rel (0) target = $region21
    $region20: #{_forward_impl.1} parent=1 // pred_region
      _
    $region21: #{_forward_impl.1} parent=1 // pred_fallthru
      _
    %249 = vsyncpa [#allocation3], 1

</llo_original>
